<compile_context>
chip_gen: v6e
topology: v6e:2x2x1
jax: 0.10.0
libtpu: 0.0.40
codegen_flags: <defaults>
</compile_context>

<pallas_src>
import functools
import math

import jax
import jax.numpy as jnp
import numpy as np
from jax.experimental import pallas as pl
from jax.experimental.pallas import tpu as pltpu


# ----------------------------------------------------------------------------
# Kernel 1: per-tile margin score = x @ (w[1] - w[0]), lane-dense output,
#           out-of-range (padded) rows masked to -inf.
# ----------------------------------------------------------------------------
def _score_kernel(wd_ref, x_ref, s_ref, *, n_rows, tile_n):
    # wd_ref: (1, D)  f32 ranking direction (same block every step -> resident)
    # x_ref : (TN, D) tile of x in its native dtype
    # s_ref : (1, 1, TN) f32 lane-dense scores for this tile
    x = x_ref[...].astype(jnp.float32)               # per-tile upcast, in-vreg
    scores = jnp.sum(x * wd_ref[...], axis=1)        # (TN,) margin z1 - z0
    rows = pl.program_id(0) * tile_n + jax.lax.broadcasted_iota(
        jnp.int32, (1, 1, tile_n), 2)
    s_ref[...] = jnp.where(rows < n_rows,
                           scores.reshape(1, 1, tile_n),
                           -jnp.inf)


# ----------------------------------------------------------------------------
# Kernel 2: index_select(x, 0, top_idx). The scalar-prefetched indices drive the
# BlockSpec index_map, so only the k selected rows are ever DMA'd from HBM.
# ----------------------------------------------------------------------------
def _gather_kernel(idx_ref, x_row_ref, out_ref):
    del idx_ref                      # only consumed by the index_map
    out_ref[...] = x_row_ref[...]


def _choose_tile_n(n, d, itemsize, target_bytes=2 << 20, max_tile=1024):
    """~1-4 MiB x tile (fits v7x's 64 MiB VMEM with double buffering to spare)."""
    tn = max(8, min(max_tile, target_bytes // max(1, d * itemsize)))
    tn -= tn % 8                     # sublane multiple when tiling
    return int(min(n, max(8, tn)))


# ----------------------------------------------------------------------------
# Wrapper reproducing inst_selector.forward (random=False path).
# ----------------------------------------------------------------------------
def inst_selector_forward(x, w, b, inst_num=1, tile_n=None):
    n, d = x.shape
    if inst_num >= n:                # static early-return branch of the module
        return x

    # Ranking by the logit margin is identical to ranking softmax probs[:, 1];
    # the bias shift is constant so it is dropped entirely.
    w_diff = (w[1] - w[0]).astype(jnp.float32).reshape(1, d)

    if tile_n is None:
        tn = _choose_tile_n(n, d, x.dtype.itemsize)
    else:
        tn = min(int(tile_n), n)
        if tn < n and tn % 8:
            tn = max(8, tn - tn % 8)
    grid_n = pl.cdiv(n, tn)

    # 1) streaming score pass: tiled over N, double-buffered, megacore-parallel.
    scores = pl.pallas_call(
        functools.partial(_score_kernel, n_rows=n, tile_n=tn),
        out_shape=jax.ShapeDtypeStruct((grid_n, 1, tn), jnp.float32),
        grid=(grid_n,),
        in_specs=[
            pl.BlockSpec((1, d), lambda i: (0, 0)),     # w_diff (resident)
            pl.BlockSpec((tn, d), lambda i: (i, 0)),    # x tile (streamed)
        ],
        out_specs=pl.BlockSpec((1, 1, tn), lambda i: (i, 0, 0)),
        compiler_params=pltpu.CompilerParams(
            dimension_semantics=("parallel",),
            vmem_limit_bytes=32 * 1024 * 1024,          # safe on v5e/v6e/v7x
        ),
    )(w_diff, x)
    scores = scores.reshape(-1)[:n]

    # 2) top-k indices (tiny glue; k << N).
    # TODO(synk): for inst_num == 1 this could be fused into the score pass as a
    # running argmax across an "arbitrary" grid axis, removing this launch and
    # the second (tiny) pass over the selected rows.
    _, top_idx = jax.lax.top_k(scores, inst_num)
    top_idx = top_idx.astype(jnp.int32)

    # 3) row gather via data-dependent BlockSpec: only k*D elements move.
    selected = pl.pallas_call(
        _gather_kernel,
        out_shape=jax.ShapeDtypeStruct((inst_num, d), x.dtype),
        grid_spec=pltpu.PrefetchScalarGridSpec(
            num_scalar_prefetch=1,
            grid=(inst_num,),
            in_specs=[pl.BlockSpec((1, d), lambda i, idx: (idx[i], 0))],
            out_specs=pl.BlockSpec((1, d), lambda i, idx: (i, 0)),
        ),
        compiler_params=pltpu.CompilerParams(
            dimension_semantics=("arbitrary",)),
    )(top_idx, x)
    return selected


# ----------------------------------------------------------------------------
# Pure-JAX reference (mirrors the PyTorch forward) for a correctness check.
# ----------------------------------------------------------------------------
def _reference(x, w, b, inst_num):
    if inst_num >= x.shape[0]:
        return x
    logits = x.astype(jnp.float32) @ w.T + b
    probs = jax.nn.softmax(logits, axis=1)
    _, top_idx = jax.lax.top_k(probs[:, 1], inst_num)
    return x[top_idx]


if __name__ == "__main__":
    key = jax.random.PRNGKey(0)
    kx, kw, kb = jax.random.split(key, 3)

    N, D = 20, 128              # small demo shapes: 20 instances, 128-dim features
    INST_NUM = 3

    x = jax.random.normal(kx, (N, D), dtype=jnp.float32)

    # nn.Linear(D, 2) deterministic init (uniform(-1/sqrt(D), 1/sqrt(D)))
    bound = 1.0 / math.sqrt(D)
    w = jax.random.uniform(kw, (2, D), minval=-bound, maxval=bound, dtype=jnp.float32)
    b = jax.random.uniform(kb, (2,), minval=-bound, maxval=bound, dtype=jnp.float32)

    # TODO(synk): the `random=True` branch (np.random.choice on host) is host-side
    # RNG indexing and is not implemented as a kernel.

    # Multi-tile path: tile_n=8 -> 3 grid steps, partial last tile masked to -inf.
    out = jax.block_until_ready(
        inst_selector_forward(x, w, b, inst_num=INST_NUM, tile_n=8))
    ref = _reference(x, w, b, INST_NUM)
    assert out.shape == (INST_NUM, D)
    np.testing.assert_allclose(np.asarray(out), np.asarray(ref), rtol=1e-5, atol=1e-5)

    # Auto-tile (single block) path with the module default inst_num=1.
    out1 = jax.block_until_ready(inst_selector_forward(x, w, b, inst_num=1))
    ref1 = _reference(x, w, b, 1)
    np.testing.assert_allclose(np.asarray(out1), np.asarray(ref1), rtol=1e-5, atol=1e-5)

    print("KERNEL_OK")
</pallas_src>

<mosaic_0001>
module attributes {stable_mosaic.version = 11 : i64} {
  func.func @_score_kernel(%arg0: i32, %arg1: memref<1x128xf32, #tpu.memory_space<vmem>>, %arg2: memref<8x128xf32, #tpu.memory_space<vmem>>, %arg3: memref<1x1x8xf32, #tpu.memory_space<vmem>>) attributes {dimension_semantics = [#tpu.dimension_semantics<parallel>], iteration_bounds = array<i64: 3>, scalar_prefetch = 0 : i64, scratch_operands = 0 : i64, tpu.core_type = #tpu.core_type<tc>, window_params = [{pipeline_mode = #tpu.pipeline_mode<synchronous>, transform_indices = @transform_0, window_bounds = array<i64: 1, 128>}, {transform_indices = @transform_1, window_bounds = array<i64: 8, 128>}, {transform_indices = @transform_2, window_bounds = array<i64: 1, 1, 8>}]} {
    %c0 = arith.constant 0 : index
    %c0_0 = arith.constant 0 : index
    %0 = vector.load %arg2[%c0, %c0_0] : memref<8x128xf32, #tpu.memory_space<vmem>>, vector<8x128xf32>
    %c0_1 = arith.constant 0 : index
    %c0_2 = arith.constant 0 : index
    %1 = vector.load %arg1[%c0_1, %c0_2] : memref<1x128xf32, #tpu.memory_space<vmem>>, vector<1x128xf32>
    %2 = vector.broadcast %1 : vector<1x128xf32> to vector<8x128xf32>
    %3 = arith.mulf %0, %2 : vector<8x128xf32>
    %cst = arith.constant dense<0.000000e+00> : vector<8xf32>
    %4 = vector.multi_reduction <add>, %3, %cst [1] : vector<8x128xf32> to vector<8xf32>
    %c8_i32 = arith.constant 8 : i32
    %5 = arith.muli %arg0, %c8_i32 : i32
    %6 = tpu.iota {dimensions = array<i32: 2>} : vector<1x1x8xi32>
    %7 = vector.broadcast %5 : i32 to vector<1x1x8xi32>
    %8 = arith.addi %7, %6 : vector<1x1x8xi32>
    %c20_i32 = arith.constant 20 : i32
    %9 = vector.broadcast %c20_i32 : i32 to vector<1x1x8xi32>
    %10 = arith.cmpi slt, %8, %9 : vector<1x1x8xi32>
    %11 = vector.shape_cast %4 : vector<8xf32> to vector<1x1x8xf32>
    %cst_3 = arith.constant 0xFF800000 : f32
    %12 = vector.broadcast %cst_3 : f32 to vector<1x1x8xf32>
    %13 = arith.select %10, %11, %12 : vector<1x1x8xi1>, vector<1x1x8xf32>
    %c0_4 = arith.constant 0 : index
    %c0_5 = arith.constant 0 : index
    %c0_6 = arith.constant 0 : index
    %14 = vector.load %arg3[%c0_4, %c0_5, %c0_6] : memref<1x1x8xf32, #tpu.memory_space<vmem>>, vector<1x1x8xf32>
    tpu.vector_store %arg3[%c0_4, %c0_5, %c0_6], %13 {strides = array<i32>} : memref<1x1x8xf32, #tpu.memory_space<vmem>>, vector<1x1x8xf32>,
    return
  }
  func.func @transform_0(%arg0: i32) -> (i32, i32) {
    %c0_i32 = arith.constant 0 : i32
    %c0_i32_0 = arith.constant 0 : i32
    %c0_i32_1 = arith.constant 0 : i32
    return %c0_i32, %c0_i32_0 : i32, i32
  }
  func.func @transform_1(%arg0: i32) -> (i32, i32) {
    %c0_i32 = arith.constant 0 : i32
    %c0_i32_0 = arith.constant 0 : i32
    return %arg0, %c0_i32 : i32, i32
  }
  func.func @transform_2(%arg0: i32) -> (i32, i32, i32) {
    %c0_i32 = arith.constant 0 : i32
    %c0_i32_0 = arith.constant 0 : i32
    %c0_i32_1 = arith.constant 0 : i32
    return %arg0, %c0_i32, %c0_i32_0 : i32, i32, i32
  }
}

</mosaic_0001>

<llo_original>
// kernel: tpu_custom_call.1
$region0: #{tpu_custom_call.1}
  #allocation0 [shape = 'u32[]', space=smem, size = 0x4, offset = 0x4, fixed_abs, tag = 'smem constant byte address 0x4 - core index']
  #allocation1 [shape = 'u32[144,128]{1,0:T(1,128)}', space=vmem, size = 0x12000, scoped, tag = 'internal scratch']
  %s0 = inlined_call_operand.hbm [shape: f32[1,128], index: 0, kind: input, shape index: {}]
  %s1 = inlined_call_operand.hbm [shape: f32[20,128], index: 1, kind: input, shape index: {}]
  %s2 = inlined_call_operand.hbm [shape: f32[3,1,8], index: 2, kind: output, shape index: {}]
  %s3 = sld [smem:[#allocation0]]
  $region49: #{tpu_custom_call.1} parent=0
    _
  %s5 = ssub.s32 1, %s3
  %s6 = scalar_select 0, %s5, %s3
  $region1: #{tpu_custom_call.1} parent=0
    #allocation2 [shape = 'u8[512]{0}', space=vmem, size = 0x400, scoped, tag = 'input window, operand 0, single buffered']
    #allocation3 [shape = 's32[2]{0}', space=sflag, size = 0x8, scoped, tag = 'scoped memory for tpu_custom_call.1']
    #allocation4 [shape = 's32[2]{0}', space=sflag, size = 0x8, scoped, tag = 'scoped memory for tpu_custom_call.1']
    #allocation5 [shape = 'u8[8192]{0}', space=vmem, size = 0x2000, scoped, tag = 'input window, operand 1']
    #allocation6 [shape = 's32[2]{0}', space=sflag, size = 0x8, scoped, tag = 'scoped memory for tpu_custom_call.1']
    #allocation7 [shape = 'u8[1024]{0}', space=vmem, size = 0x400, scoped, tag = 'output window, operand 0']
    %7 = vsyncpa [#allocation3], 0
    %8 = vsyncpa [#allocation6], 0
    %s9 = scalar_lea.sflag [#allocation6], 1
    %10 = vsyncpa %s9, 0
    %11 = vsyncpa [#allocation4], 0
    %s12 = scalar_lea.sflag [#allocation4], 1
    %13 = vsyncpa %s12, 0
    loop: start=0, step=1, limit=5
    $region2: #{tpu_custom_call.1} parent=1 // loop_pre_header
      _
    $region3: #{tpu_custom_call.1} parent=1 // loop_header
      %s15 = sphi 0, %s19
      %p16 = scmp.ge.s32.totalorder %s15, 5
      %s23 = sphi 0, %s23
      %s25 = sphi 0, %s23
      %s26 = sphi 0, %s25
      %s40 = sphi 0, %s26
      %s46 = sphi 0, %s48
      %s49 = sphi 0, %s46
      %s50 = sphi 0, %s49
      %s66 = sphi 0, %s50
      %s72 = sphi 0, %s74
      %s75 = sphi 0, %s72
      %s76 = sphi 0, %s75
      %s92 = sphi 0, %s76
    $region4: #{tpu_custom_call.1} parent=1 // loop_header_branch
      %18 = sbr.rel (%p16) target = $region8
    $region5: #{tpu_custom_call.1} parent=1 // loop_body
      %s20 = ssub.s32 %s15, 1
      %s21 = ssub.s32 %s15, 2
      %s22 = sadd.s32 %s15, 1
      %s24 = sadd.s32 %s23, 1
      %p27 = scmp.eq.s32.totalorder %s15, 2
      %p28 = scmp.ne.s32.totalorder %s23, %s25
      %p29 = scmp.eq.s32.totalorder %s15, 0
      %p30 = por %p28, %p29
      %p31 = scmp.ne.s32.totalorder %s23, %s25
      %p32 = scmp.eq.s32.totalorder %s20, 2
      %p33 = por %p31, %p32
      %p34 = scmp.ne.s32.totalorder %s25, %s26
      %p35 = scmp.eq.s32.totalorder %s20, 0
      %p36 = por %p34, %p35
      %p37 = scmp.ne.s32.totalorder %s25, %s26
      %p38 = scmp.eq.s32.totalorder %s21, 2
      %p39 = por %p37, %p38
      %p41 = scmp.ne.s32.totalorder %s26, %s40
      %p42 = scmp.eq.s32.totalorder %s21, 0
      %p43 = por %p41, %p42
      %s44 = ssub.s32 %s15, %s22
      %p45 = scmp.eq.s32.totalorder %s44, 0
      %s47 = sadd.s32 %s46, 1
      %s48 = scalar_select %p45, %s46, %s47
      %p51 = pneg %p45
      %p52 = scmp.eq.s32.totalorder %s15, 2
      %p53 = por %p51, %p52
      %p54 = scmp.ne.s32.totalorder %s46, %s49
      %p55 = scmp.eq.s32.totalorder %s15, 0
      %p56 = por %p54, %p55
      %p57 = scmp.ne.s32.totalorder %s46, %s49
      %p58 = scmp.eq.s32.totalorder %s20, 2
      %p59 = por %p57, %p58
      %p60 = scmp.ne.s32.totalorder %s49, %s50
      %p61 = scmp.eq.s32.totalorder %s20, 0
      %p62 = por %p60, %p61
      %p63 = scmp.ne.s32.totalorder %s49, %s50
      %p64 = scmp.eq.s32.totalorder %s21, 2
      %p65 = por %p63, %p64
      %p67 = scmp.ne.s32.totalorder %s50, %s66
      %p68 = scmp.eq.s32.totalorder %s21, 0
      %p69 = por %p67, %p68
      %s70 = ssub.s32 %s15, %s22
      %p71 = scmp.eq.s32.totalorder %s70, 0
      %s73 = sadd.s32 %s72, 1
      %s74 = scalar_select %p71, %s72, %s73
      %p77 = pneg %p71
      %p78 = scmp.eq.s32.totalorder %s15, 2
      %p79 = por %p77, %p78
      %p80 = scmp.ne.s32.totalorder %s72, %s75
      %p81 = scmp.eq.s32.totalorder %s15, 0
      %p82 = por %p80, %p81
      %p83 = scmp.ne.s32.totalorder %s72, %s75
      %p84 = scmp.eq.s32.totalorder %s20, 2
      %p85 = por %p83, %p84
      %p86 = scmp.ne.s32.totalorder %s75, %s76
      %p87 = scmp.eq.s32.totalorder %s20, 0
      %p88 = por %p86, %p87
      %p89 = scmp.ne.s32.totalorder %s75, %s76
      %p90 = scmp.eq.s32.totalorder %s21, 2
      %p91 = por %p89, %p90
      %p93 = scmp.ne.s32.totalorder %s76, %s92
      %p94 = scmp.eq.s32.totalorder %s21, 0
      %p95 = por %p93, %p94
      %p96 = scmp.le.s32.totalorder 1, %s15
      %p97 = scmp.lt.s32.totalorder %s15, 4
      %p98 = pnand %p96, %p97
      %p99 = pneg %p98
      // Predicated region
      $region9: #{tpu_custom_call.1} parent=5 // pred_check
        _
      $region10: #{tpu_custom_call.1} parent=5 // pred_check_branch
        %101 = sbr.rel (%p98) target = $region12
      $region11: #{tpu_custom_call.1} parent=5 // pred_region
        %s102 = ssub.s32 %s15, 1
        // Predicated region
        $region13: #{tpu_custom_call.1} parent=11 // pred_check
          %p103 = pneg %p36
        $region14: #{tpu_custom_call.1} parent=11 // pred_check_branch
          %105 = sbr.rel (%p103) target = $region16
        $region15: #{tpu_custom_call.1} parent=11 // pred_region
          %s107 = ssub.s32 16, 16
          %108 = vsyncadd [#allocation3], %s107
          %s110 = sshll.u32 [#allocation2], 4
          %s111 = int_to_ptr.vmem [resolvable:$true] %s110
          %113 = dma.hbm_to_vmem [thread:$0]  %s0, 16, %s111, [#allocation3]
        $region16: #{tpu_custom_call.1} parent=11 // pred_fallthru
          _
      $region12: #{tpu_custom_call.1} parent=5 // pred_fallthru
        _
      %p114 = scmp.lt.s32.totalorder %s15, 3
      // Predicated region
      $region17: #{tpu_custom_call.1} parent=5 // pred_check
        %p115 = pneg %p114
      $region18: #{tpu_custom_call.1} parent=5 // pred_check_branch
        %117 = sbr.rel (%p115) target = $region20
      $region19: #{tpu_custom_call.1} parent=5 // pred_region
        // Predicated region
        $region21: #{tpu_custom_call.1} parent=19 // pred_check
          %p118 = pneg %p56
        $region22: #{tpu_custom_call.1} parent=19 // pred_check_branch
          %120 = sbr.rel (%p118) target = $region24
        $region23: #{tpu_custom_call.1} parent=19 // pred_region
          %s121 = sand.u32 %s46, 1
          %s122 = scalar_lea.sflag [#allocation6], %s121
          %s123 = sand.u32 %s46, 1
          %s124 = smul.addr %s123, 8
          %s125 = scalar_lea.vmem [#allocation5], %s124
          %s127 = ssub.s32 128, 128
          %128 = vsyncadd %s122, %s127
          %s129 = smul.addr %s15, 128
          %s130 = scalar_lea.hbm %s1, %s129
          %s132 = sshll.u32 %s125, 4
          %s133 = int_to_ptr.vmem [resolvable:$true] %s132
          %135 = dma.hbm_to_vmem [thread:$0]  %s130, 128, %s133, %s122
        $region24: #{tpu_custom_call.1} parent=19 // pred_fallthru
          _
      $region20: #{tpu_custom_call.1} parent=5 // pred_fallthru
        _
      %p136 = scmp.le.s32.totalorder 1, %s15
      %p137 = scmp.lt.s32.totalorder %s15, 4
      %p138 = pnand %p136, %p137
      %p139 = pneg %p138
      // Predicated region
      $region25: #{tpu_custom_call.1} parent=5 // pred_check
        _
      $region26: #{tpu_custom_call.1} parent=5 // pred_check_branch
        %141 = sbr.rel (%p138) target = $region28
      $region27: #{tpu_custom_call.1} parent=5 // pred_region
        %s142 = ssub.s32 %s15, 1
        // Predicated region
        $region29: #{tpu_custom_call.1} parent=27 // pred_check
          %p143 = pneg %p36
        $region30: #{tpu_custom_call.1} parent=27 // pred_check_branch
          %145 = sbr.rel (%p143) target = $region32
        $region31: #{tpu_custom_call.1} parent=27 // pred_region
          %146 = dma.done [#allocation3], 16
        $region32: #{tpu_custom_call.1} parent=27 // pred_fallthru
          _
        %s147 = sand.u32 %s49, 1
        %s148 = scalar_lea.sflag [#allocation6], %s147
        %s149 = sand.u32 %s49, 1
        %s150 = smul.addr %s149, 8
        %s151 = scalar_lea.vmem [#allocation5], %s150
        // Predicated region
        $region33: #{tpu_custom_call.1} parent=27 // pred_check
          %p152 = pneg %p62
        $region34: #{tpu_custom_call.1} parent=27 // pred_check_branch
          %154 = sbr.rel (%p152) target = $region36
        $region35: #{tpu_custom_call.1} parent=27 // pred_region
          %155 = dma.done %s148, 128
        $region36: #{tpu_custom_call.1} parent=27 // pred_fallthru
          _
        %p156 = pneg %p36
        %p157 = pneg %p33
        %s158 = sand.u32 %s49, 1
        %s159 = scalar_lea.sflag [#allocation6], %s158
        %s160 = sand.u32 %s49, 1
        %s161 = smul.addr %s160, 8
        %s162 = scalar_lea.vmem [#allocation5], %s161
        %p163 = pneg %p62
        %p164 = pneg %p59
        %p165 = pneg %p88
        %p166 = pneg %p85
        %s167 = sand.u32 %s75, 1
        %s168 = scalar_lea.sflag [#allocation4], %s167
        %s169 = sand.u32 %s75, 1
        %s170 = scalar_lea.vmem [#allocation7], %s169
        %v171 = vld [vmem:[%s151] sm:$0xff]
        %v172 = vld [vmem:[#allocation2] sm:$0x1]
        %v174 = vlaneseq
        %v175 = vshrl.u32 %v174, 7
        %v176 = vsub.s32 0, %v175
        %v177 = vrot.slane %v172, %v176
        %v179 = vmul.f32 %v171, %v177
        %180 = vadd.xlane.f32.xlu0 %v179
        %v181 = vpop.xlane.xlu0 %180
        %s182 = smul.u32 %s20, 8
        %v183 = vlaneseq
        %v184 = vand.u32 %v183, 127
        %v185 = vstv %s182
        %v186 = vadd.s32 %v185, %v184
        %vm187 = vcmp.lt.s32.totalorder %v186, 20
        %v189 = vlaneseq
        %v190 = vshrl.u32 %v189, 7
        %v191 = vsub.s32 %v184, %v190
        %v192 = vrot.slane %v181, %v191
        %v194 = vsel %vm187, %v192, -inf
        %vm195 = vcmask 57344
        %196 = vst.msk [vmem:[%s170] sm:$0x1] %vm195, %v194
        %s197 = sand.u32 %s75, 1
        %s198 = scalar_lea.sflag [#allocation4], %s197
        %s199 = sand.u32 %s75, 1
        %s200 = scalar_lea.vmem [#allocation7], %s199
        // Predicated region
        $region37: #{tpu_custom_call.1} parent=27 // pred_check
          %p201 = pneg %p85
        $region38: #{tpu_custom_call.1} parent=27 // pred_check_branch
          %203 = sbr.rel (%p201) target = $region40
        $region39: #{tpu_custom_call.1} parent=27 // pred_region
          %s205 = ssub.s32 16, 16
          %206 = vsyncadd %s198, %s205
          %s207 = smul.addr %s20, 16
          %s208 = scalar_lea.hbm %s2, %s207
          %s210 = sshll.u32 %s200, 4
          %s211 = int_to_ptr.vmem [resolvable:$true] %s210
          %213 = dma.vmem_to_hbm [thread:$0]  %s211, 16, %s208, %s198
        $region40: #{tpu_custom_call.1} parent=27 // pred_fallthru
          _
      $region28: #{tpu_custom_call.1} parent=5 // pred_fallthru
        _
      %p214 = scmp.le.s32.totalorder 2, %s15
      // Predicated region
      $region41: #{tpu_custom_call.1} parent=5 // pred_check
        %p215 = pneg %p214
      $region42: #{tpu_custom_call.1} parent=5 // pred_check_branch
        %217 = sbr.rel (%p215) target = $region44
      $region43: #{tpu_custom_call.1} parent=5 // pred_region
        %s218 = ssub.s32 %s15, 2
        // Predicated region
        $region45: #{tpu_custom_call.1} parent=43 // pred_check
          %p219 = pneg %p91
        $region46: #{tpu_custom_call.1} parent=43 // pred_check_branch
          %221 = sbr.rel (%p219) target = $region48
        $region47: #{tpu_custom_call.1} parent=43 // pred_region
          %s222 = sand.u32 %s76, 1
          %s223 = scalar_lea.sflag [#allocation4], %s222
          %s224 = sand.u32 %s76, 1
          %s225 = scalar_lea.vmem [#allocation7], %s224
          %226 = dma.done %s223, 16
        $region48: #{tpu_custom_call.1} parent=43 // pred_fallthru
          _
      $region44: #{tpu_custom_call.1} parent=5 // pred_fallthru
        _
    $region6: #{tpu_custom_call.1} parent=1 // loop_footer
      %s19 = sadd.s32 1, %s15
    $region7: #{tpu_custom_call.1} parent=1 // loop_footer_branch
      %14 = sbr.rel target = $region3
    $region8: #{tpu_custom_call.1} parent=1 // loop_exit
      _
    %227 = vsyncpa [#allocation3], 1
    %s228 = scalar_lea.sflag [#allocation3], 1
    %229 = vsyncpa %s228, 1
    %230 = vsyncpa [#allocation6], 1
    %s231 = scalar_lea.sflag [#allocation6], 1
    %232 = vsyncpa %s231, 1
    %233 = vsyncpa [#allocation4], 1
    %s234 = scalar_lea.sflag [#allocation4], 1
    %235 = vsyncpa %s234, 1

</llo_original>
